<compile_context>
chip_gen: v7x
topology: tpu7x:2x2x1
jax: 0.10.0
libtpu: 0.0.40
codegen_flags: <defaults>
</compile_context>

<pallas_src>
import math
import numpy as np

import jax
import jax.numpy as jnp
from jax import lax
from jax.experimental import pallas as pl
from jax.experimental.pallas import tpu as pltpu

_LANE = 128      # pad seq to a multiple of 128
_NEG = -1e9      # pad logit -> exp underflows to exactly 0 (no NaN anywhere)


def _mha_kernel(value_ref, query_ref, mask_ref,
                w_fused_ref, b_fused_ref, gamma_ref, beta_ref,
                out_ref):
    """One grid step processes `bblk` batch elements (statically unrolled)."""
    bblk = value_ref.shape[0]
    w_fused = w_fused_ref[...]      # (D, D), pre-transposed: fc = ctx @ w_fused
    b_fused = b_fused_ref[...]      # (1, D)
    gamma = gamma_ref[...]          # (1, D)
    beta = beta_ref[...]            # (1, D)

    for b in range(bblk):           # bblk is tiny (1 or B) -> cheap unroll
        # Effective attention weights: softmax(mask_byte.float(), axis=-1).
        # (padded columns hold -1e9 -> exp underflows to exactly 0)
        logits = mask_ref[b].astype(jnp.float32)               # (S, S)
        m = jnp.max(logits, axis=-1, keepdims=True)
        e = jnp.exp(logits - m)
        denom = jnp.sum(e, axis=-1, keepdims=True)
        attn = e * pl.reciprocal(denom, approx=True)           # EUP slot, VPU mul

        # Same attn for both heads => concat_h(attn @ v_h) == attn @ v.
        ctx = jnp.dot(attn, value_ref[b],
                      preferred_element_type=jnp.float32)      # (S, D)

        # Fused value+output projection, residual, LayerNorm (eps=1e-5).
        fc = jnp.dot(ctx, w_fused,
                     preferred_element_type=jnp.float32) + b_fused
        x = fc + query_ref[b]
        mu = jnp.mean(x, axis=-1, keepdims=True)
        xc = x - mu
        var = jnp.mean(xc * xc, axis=-1, keepdims=True)
        y = xc * lax.rsqrt(var + 1e-5)
        out_ref[b] = y * gamma + beta


def multi_head_attention(key_x, value_x, query_x, mask, params, *, batch_block=1):
    """key_x/value_x/query_x: (B, S, D) f32; mask: (B, S, S) int (byte-valued).

    key_x is accepted for API parity with the PyTorch forward but never sent to
    the kernel (the mask branch discards the q@k.T scores, so key/query
    projections are dead code).  `batch_block` = batch elements per grid step:
    1 keeps a batch-parallel grid (both v7x TensorCores take one element each);
    use batch_block=B on single-TC v5e/v6e to amortize the ~0.35us/step cost.
    """
    del key_x
    B, S, D = value_x.shape
    assert B % batch_block == 0
    wk, bk, wv, bv, wq, bq, wfc, bfc, gamma, beta = params
    del wk, bk, wq, bq   # dead in the effective forward; never DMA'd

    # Fuse value + output projections at trace time (host side, full f32):
    #   fc = (attn @ v_in) @ (Wfc @ Wv)^T + (Wfc @ bv + bfc)
    w_fused = jnp.dot(wfc, wv, precision="highest").T          # (D, D)
    b_fused = jnp.dot(wfc, bv, precision="highest") + bfc      # (D,)

    # Pad seq 100 -> 128; padded mask entries get a large negative logit so the
    # padded columns receive exactly zero attention weight (result is exact).
    s_pad = pl.cdiv(S, _LANE) * _LANE
    pad = s_pad - S
    value_p = jnp.pad(value_x, ((0, 0), (0, pad), (0, 0)))
    query_p = jnp.pad(query_x, ((0, 0), (0, pad), (0, 0)))
    # `.byte()` semantics of the reference; shipped as bf16 (exact for 0..255,
    # halves the dominant HBM read vs f32).
    mask_f = mask.astype(jnp.uint8).astype(jnp.float32)
    mask_p = jnp.pad(mask_f, ((0, 0), (0, pad), (0, pad)), constant_values=_NEG)
    mask_bf = mask_p.astype(jnp.bfloat16)

    row = lambda a: a.reshape(1, -1)   # biases / LN params as (1, D)

    bblk = batch_block
    bspec_x = pl.BlockSpec((bblk, s_pad, D), lambda b: (b, 0, 0))
    bspec_m = pl.BlockSpec((bblk, s_pad, s_pad), lambda b: (b, 0, 0))
    bspec_w = pl.BlockSpec((D, D), lambda b: (0, 0))
    bspec_b = pl.BlockSpec((1, D), lambda b: (0, 0))

    out_p = pl.pallas_call(
        _mha_kernel,
        out_shape=jax.ShapeDtypeStruct((B, s_pad, D), jnp.float32),
        grid_spec=pltpu.PrefetchScalarGridSpec(
            num_scalar_prefetch=0,
            grid=(B // bblk,),
            in_specs=[bspec_x, bspec_x, bspec_m,
                      bspec_w, bspec_b, bspec_b, bspec_b],
            out_specs=bspec_x,
        ),
        compiler_params=pltpu.CompilerParams(
            dimension_semantics=("parallel",)),
    )(value_p, query_p, mask_bf, w_fused, row(b_fused), row(gamma), row(beta))

    return out_p[:, :S, :]


def reference(key_x, value_x, query_x, mask, params):
    """Pure-JAX transcription of the PyTorch forward (eval mode)."""
    wk, bk, wv, bv, wq, bq, wfc, bfc, gamma, beta = params
    B, S, D = key_x.shape
    dph = D // 2

    with jax.default_matmul_precision("highest"):
        k = key_x @ wk.T + bk
        v = value_x @ wv.T + bv
        q = query_x @ wq.T + bq

        def split(x):
            return x.reshape(B, S, 2, dph).transpose(2, 0, 1, 3).reshape(2 * B, S, dph)

        vh = split(v)
        mask_rep = jnp.tile(mask.astype(jnp.uint8), (2, 1, 1))
        attn = jnp.where(mask_rep == 0, jnp.uint8(0), mask_rep).astype(jnp.float32)
        attn = jax.nn.softmax(attn, axis=2)
        out = attn @ vh                                        # (2B, S, dph)
        out = out.reshape(2, B, S, dph).transpose(1, 2, 0, 3).reshape(B, S, D)
        out = out @ wfc.T + bfc
        x = out + query_x
        mu = x.mean(-1, keepdims=True)
        var = ((x - mu) ** 2).mean(-1, keepdims=True)
        return (x - mu) / jnp.sqrt(var + 1e-5) * gamma + beta


if __name__ == "__main__":
    B, D = 2, 32          # dim_proj=32 -> dim_per_head=16, head_count=2
    S = 100               # hard-coded by the reference module's .view(-1, 100, dph)

    root = jax.random.PRNGKey(0)
    keys = jax.random.split(root, 12)

    def lin_init(kw, kb, fan_in, out_f):
        bound = 1.0 / math.sqrt(fan_in)
        w = jax.random.uniform(kw, (out_f, fan_in), jnp.float32, -bound, bound)
        b = jax.random.uniform(kb, (out_f,), jnp.float32, -bound, bound)
        return w, b

    wk, bk = lin_init(keys[0], keys[1], D, D)
    wv, bv = lin_init(keys[2], keys[3], D, D)
    wq, bq = lin_init(keys[4], keys[5], D, D)
    wfc, bfc = lin_init(keys[6], keys[7], D, D)
    gamma = jnp.ones((D,), jnp.float32)
    beta = jnp.zeros((D,), jnp.float32)
    params = (wk, bk, wv, bv, wq, bq, wfc, bfc, gamma, beta)

    key_x = jax.random.normal(keys[8], (B, S, D), jnp.float32)
    value_x = jax.random.normal(keys[9], (B, S, D), jnp.float32)
    query_x = jax.random.normal(keys[10], (B, S, D), jnp.float32)
    mask = jax.random.randint(keys[11], (B, S, S), 0, 2).astype(jnp.int32)

    ref = reference(key_x, value_x, query_x, mask, params)

    # batch_block=1: batch-parallel grid (one element per TensorCore on v7x).
    out1 = jax.block_until_ready(
        multi_head_attention(key_x, value_x, query_x, mask, params, batch_block=1))
    # batch_block=B: everything in one grid step (amortizes per-step overhead
    # on single-TensorCore v5e/v6e).
    out2 = jax.block_until_ready(
        multi_head_attention(key_x, value_x, query_x, mask, params, batch_block=B))

    assert out1.shape == (B, S, D) and out2.shape == (B, S, D)
    # Tolerance covers bf16 MXU-pass rounding (the Wv/Wfc fusion reassociates
    # the matmul order vs the reference, so input roundings no longer cancel)
    # plus the approximate EUP reciprocal used for the softmax denominator.
    np.testing.assert_allclose(np.asarray(out1), np.asarray(ref), rtol=5e-3, atol=5e-3)
    np.testing.assert_allclose(np.asarray(out2), np.asarray(ref), rtol=5e-3, atol=5e-3)
    print("KERNEL_OK")
</pallas_src>

<mosaic_0001>
module attributes {stable_mosaic.version = 11 : i64} {
  func.func @_mha_kernel(%arg0: i32, %arg1: memref<1x128x32xf32, #tpu.memory_space<vmem>>, %arg2: memref<1x128x32xf32, #tpu.memory_space<vmem>>, %arg3: memref<1x128x128xbf16, #tpu.memory_space<vmem>>, %arg4: memref<32x32xf32, #tpu.memory_space<vmem>>, %arg5: memref<1x32xf32, #tpu.memory_space<vmem>>, %arg6: memref<1x32xf32, #tpu.memory_space<vmem>>, %arg7: memref<1x32xf32, #tpu.memory_space<vmem>>, %arg8: memref<1x128x32xf32, #tpu.memory_space<vmem>>) attributes {dimension_semantics = [#tpu.dimension_semantics<parallel>], iteration_bounds = array<i64: 2>, scalar_prefetch = 0 : i64, scratch_operands = 0 : i64, tpu.core_type = #tpu.core_type<tc>, window_params = [{transform_indices = @transform_0, window_bounds = array<i64: 1, 128, 32>}, {transform_indices = @transform_1, window_bounds = array<i64: 1, 128, 32>}, {transform_indices = @transform_2, window_bounds = array<i64: 1, 128, 128>}, {pipeline_mode = #tpu.pipeline_mode<synchronous>, transform_indices = @transform_3, window_bounds = array<i64: 32, 32>}, {pipeline_mode = #tpu.pipeline_mode<synchronous>, transform_indices = @transform_4, window_bounds = array<i64: 1, 32>}, {pipeline_mode = #tpu.pipeline_mode<synchronous>, transform_indices = @transform_5, window_bounds = array<i64: 1, 32>}, {pipeline_mode = #tpu.pipeline_mode<synchronous>, transform_indices = @transform_6, window_bounds = array<i64: 1, 32>}, {transform_indices = @transform_7, window_bounds = array<i64: 1, 128, 32>}]} {
    %c0 = arith.constant 0 : index
    %c0_0 = arith.constant 0 : index
    %0 = vector.load %arg4[%c0, %c0_0] : memref<32x32xf32, #tpu.memory_space<vmem>>, vector<32x32xf32>
    %c0_1 = arith.constant 0 : index
    %c0_2 = arith.constant 0 : index
    %1 = vector.load %arg5[%c0_1, %c0_2] : memref<1x32xf32, #tpu.memory_space<vmem>>, vector<1x32xf32>
    %c0_3 = arith.constant 0 : index
    %c0_4 = arith.constant 0 : index
    %2 = vector.load %arg6[%c0_3, %c0_4] : memref<1x32xf32, #tpu.memory_space<vmem>>, vector<1x32xf32>
    %c0_5 = arith.constant 0 : index
    %c0_6 = arith.constant 0 : index
    %3 = vector.load %arg7[%c0_5, %c0_6] : memref<1x32xf32, #tpu.memory_space<vmem>>, vector<1x32xf32>
    %c0_7 = arith.constant 0 : index
    %c0_8 = arith.constant 0 : index
    %c0_9 = arith.constant 0 : index
    %4 = vector.load %arg3[%c0_7, %c0_8, %c0_9] : memref<1x128x128xbf16, #tpu.memory_space<vmem>>, vector<1x128x128xbf16>
    %5 = vector.shape_cast %4 : vector<1x128x128xbf16> to vector<128x128xbf16>
    %6 = arith.extf %5 : vector<128x128xbf16> to vector<128x128xf32>
    %cst = arith.constant dense<0xFF800000> : vector<128xf32>
    %7 = vector.multi_reduction <maximumf>, %6, %cst [1] : vector<128x128xf32> to vector<128xf32>
    %8 = vector.shape_cast %7 : vector<128xf32> to vector<128x1xf32>
    %9 = vector.broadcast %8 : vector<128x1xf32> to vector<128x128xf32>
    %10 = arith.subf %6, %9 : vector<128x128xf32>
    %11 = math.exp %10 : vector<128x128xf32>
    %cst_10 = arith.constant dense<0.000000e+00> : vector<128xf32>
    %12 = vector.multi_reduction <add>, %11, %cst_10 [1] : vector<128x128xf32> to vector<128xf32>
    %13 = vector.shape_cast %12 : vector<128xf32> to vector<128x1xf32>
    %14 = tpu.reciprocal %13 {approx = true} : vector<128x1xf32> -> vector<128x1xf32>
    %15 = vector.broadcast %14 : vector<128x1xf32> to vector<128x128xf32>
    %16 = arith.mulf %11, %15 : vector<128x128xf32>
    %c0_11 = arith.constant 0 : index
    %c0_12 = arith.constant 0 : index
    %c0_13 = arith.constant 0 : index
    %17 = vector.load %arg1[%c0_11, %c0_12, %c0_13] : memref<1x128x32xf32, #tpu.memory_space<vmem>>, vector<1x128x32xf32>
    %18 = vector.shape_cast %17 : vector<1x128x32xf32> to vector<128x32xf32>
    %cst_14 = arith.constant dense<0.000000e+00> : vector<128x32xf32>
    %19 = tpu.matmul %16, %18, %cst_14 {dimension_numbers = #tpu.dot_dimension_numbers<[1], [0], [0], [1], [0, 0, 1, 1], [], []>} : vector<128x128xf32>, vector<128x32xf32>, vector<128x32xf32> -> vector<128x32xf32>
    %cst_15 = arith.constant dense<0.000000e+00> : vector<128x32xf32>
    %20 = tpu.matmul %19, %0, %cst_15 {dimension_numbers = #tpu.dot_dimension_numbers<[1], [0], [0], [1], [0, 0, 1, 1], [], []>} : vector<128x32xf32>, vector<32x32xf32>, vector<128x32xf32> -> vector<128x32xf32>
    %21 = vector.broadcast %1 : vector<1x32xf32> to vector<128x32xf32>
    %22 = arith.addf %20, %21 : vector<128x32xf32>
    %c0_16 = arith.constant 0 : index
    %c0_17 = arith.constant 0 : index
    %c0_18 = arith.constant 0 : index
    %23 = vector.load %arg2[%c0_16, %c0_17, %c0_18] : memref<1x128x32xf32, #tpu.memory_space<vmem>>, vector<1x128x32xf32>
    %24 = vector.shape_cast %23 : vector<1x128x32xf32> to vector<128x32xf32>
    %25 = arith.addf %22, %24 : vector<128x32xf32>
    %cst_19 = arith.constant dense<0.000000e+00> : vector<128xf32>
    %26 = vector.multi_reduction <add>, %25, %cst_19 [1] : vector<128x32xf32> to vector<128xf32>
    %27 = vector.shape_cast %26 : vector<128xf32> to vector<128x1xf32>
    %cst_20 = arith.constant 3.200000e+01 : f32
    %28 = vector.broadcast %cst_20 : f32 to vector<128x1xf32>
    %29 = arith.divf %27, %28 : vector<128x1xf32>
    %30 = vector.broadcast %29 : vector<128x1xf32> to vector<128x32xf32>
    %31 = arith.subf %25, %30 : vector<128x32xf32>
    %32 = arith.mulf %31, %31 : vector<128x32xf32>
    %cst_21 = arith.constant dense<0.000000e+00> : vector<128xf32>
    %33 = vector.multi_reduction <add>, %32, %cst_21 [1] : vector<128x32xf32> to vector<128xf32>
    %34 = vector.shape_cast %33 : vector<128xf32> to vector<128x1xf32>
    %cst_22 = arith.constant 3.200000e+01 : f32
    %35 = vector.broadcast %cst_22 : f32 to vector<128x1xf32>
    %36 = arith.divf %34, %35 : vector<128x1xf32>
    %cst_23 = arith.constant 9.99999974E-6 : f32
    %37 = vector.broadcast %cst_23 : f32 to vector<128x1xf32>
    %38 = arith.addf %36, %37 : vector<128x1xf32>
    %39 = math.rsqrt %38 : vector<128x1xf32>
    %40 = vector.broadcast %39 : vector<128x1xf32> to vector<128x32xf32>
    %41 = arith.mulf %31, %40 : vector<128x32xf32>
    %42 = vector.broadcast %2 : vector<1x32xf32> to vector<128x32xf32>
    %43 = arith.mulf %41, %42 : vector<128x32xf32>
    %44 = vector.broadcast %3 : vector<1x32xf32> to vector<128x32xf32>
    %45 = arith.addf %43, %44 : vector<128x32xf32>
    %c0_24 = arith.constant 0 : index
    %c0_25 = arith.constant 0 : index
    %c0_26 = arith.constant 0 : index
    %46 = vector.load %arg8[%c0_24, %c0_25, %c0_26] : memref<1x128x32xf32, #tpu.memory_space<vmem>>, vector<1x128x32xf32>
    %47 = vector.shape_cast %46 : vector<1x128x32xf32> to vector<128x32xf32>
    %48 = vector.shape_cast %45 : vector<128x32xf32> to vector<1x128x32xf32>
    tpu.vector_store %arg8[%c0_24, %c0_25, %c0_26], %48 {strides = array<i32>} : memref<1x128x32xf32, #tpu.memory_space<vmem>>, vector<1x128x32xf32>,
    return
  }
  func.func @transform_0(%arg0: i32) -> (i32, i32, i32) {
    %c0_i32 = arith.constant 0 : i32
    %c0_i32_0 = arith.constant 0 : i32
    %c0_i32_1 = arith.constant 0 : i32
    return %arg0, %c0_i32, %c0_i32_0 : i32, i32, i32
  }
  func.func @transform_1(%arg0: i32) -> (i32, i32, i32) {
    %c0_i32 = arith.constant 0 : i32
    %c0_i32_0 = arith.constant 0 : i32
    %c0_i32_1 = arith.constant 0 : i32
    return %arg0, %c0_i32, %c0_i32_0 : i32, i32, i32
  }
  func.func @transform_2(%arg0: i32) -> (i32, i32, i32) {
    %c0_i32 = arith.constant 0 : i32
    %c0_i32_0 = arith.constant 0 : i32
    %c0_i32_1 = arith.constant 0 : i32
    return %arg0, %c0_i32, %c0_i32_0 : i32, i32, i32
  }
  func.func @transform_3(%arg0: i32) -> (i32, i32) {
    %c0_i32 = arith.constant 0 : i32
    %c0_i32_0 = arith.constant 0 : i32
    %c0_i32_1 = arith.constant 0 : i32
    return %c0_i32, %c0_i32_0 : i32, i32
  }
  func.func @transform_4(%arg0: i32) -> (i32, i32) {
    %c0_i32 = arith.constant 0 : i32
    %c0_i32_0 = arith.constant 0 : i32
    %c0_i32_1 = arith.constant 0 : i32
    return %c0_i32, %c0_i32_0 : i32, i32
  }
  func.func @transform_5(%arg0: i32) -> (i32, i32) {
    %c0_i32 = arith.constant 0 : i32
    %c0_i32_0 = arith.constant 0 : i32
    %c0_i32_1 = arith.constant 0 : i32
    return %c0_i32, %c0_i32_0 : i32, i32
  }
  func.func @transform_6(%arg0: i32) -> (i32, i32) {
    %c0_i32 = arith.constant 0 : i32
    %c0_i32_0 = arith.constant 0 : i32
    %c0_i32_1 = arith.constant 0 : i32
    return %c0_i32, %c0_i32_0 : i32, i32
  }
  func.func @transform_7(%arg0: i32) -> (i32, i32, i32) {
    %c0_i32 = arith.constant 0 : i32
    %c0_i32_0 = arith.constant 0 : i32
    %c0_i32_1 = arith.constant 0 : i32
    return %arg0, %c0_i32, %c0_i32_0 : i32, i32, i32
  }
}

</mosaic_0001>

<llo_original>
// kernel: tpu_custom_call.1
$region0: #{tpu_custom_call.1}
  #allocation0 [shape = 'u32[]', space=smem, size = 0x4, offset = 0x4, fixed_abs, tag = 'smem constant byte address 0x4 - core index']
  #allocation1 [shape = 'u32[144,128]{1,0:T(1,128)}', space=vmem, size = 0x12000, scoped, tag = 'internal scratch']
  %s0 = inlined_call_operand.vmem [shape: f32[2,128,32], index: 0, kind: input, shape index: {}]
  %s1 = inlined_call_operand.vmem [shape: f32[2,128,32], index: 1, kind: input, shape index: {}]
  %s2 = inlined_call_operand.vmem [shape: bf16[2,128,128], index: 2, kind: input, shape index: {}]
  %s3 = inlined_call_operand.vmem [shape: f32[32,32], index: 3, kind: input, shape index: {}]
  %s4 = inlined_call_operand.vmem [shape: f32[1,32], index: 4, kind: input, shape index: {}]
  %s5 = inlined_call_operand.vmem [shape: f32[1,32], index: 5, kind: input, shape index: {}]
  %s6 = inlined_call_operand.vmem [shape: f32[1,32], index: 6, kind: input, shape index: {}]
  %s7 = inlined_call_operand.vmem [shape: f32[2,128,32], index: 7, kind: output, shape index: {}]
  %s8 = sld [smem:[#allocation0]]
  $region61: #{tpu_custom_call.1} parent=0
    _
  %s10 = ssub.s32 1, %s8
  %s11 = scalar_select 0, %s10, %s8
  loop: start=0, step=1, limit=4
  $region2: #{tpu_custom_call.1} parent=0 // loop_pre_header
    _
  $region3: #{tpu_custom_call.1} parent=0 // loop_header
    %s13 = sphi 0, %s17
    %p14 = scmp.ge.s32.totalorder %s13, 4
    %s23 = sphi 0, %s25
    %s26 = sphi 0, %s23
    %s27 = sphi 0, %s26
    %s43 = sphi 0, %s27
    %s49 = sphi 0, %s51
    %s52 = sphi 0, %s49
    %s53 = sphi 0, %s52
    %s69 = sphi 0, %s53
    %s75 = sphi 0, %s77
    %s78 = sphi 0, %s75
    %s79 = sphi 0, %s78
    %s95 = sphi 0, %s79
    %s99 = sphi 0, %s99
    %s101 = sphi 0, %s99
    %s102 = sphi 0, %s101
    %s116 = sphi 0, %s102
    %s120 = sphi 0, %s120
    %s122 = sphi 0, %s120
    %s123 = sphi 0, %s122
    %s137 = sphi 0, %s123
    %s141 = sphi 0, %s141
    %s143 = sphi 0, %s141
    %s144 = sphi 0, %s143
    %s158 = sphi 0, %s144
    %s162 = sphi 0, %s162
    %s164 = sphi 0, %s162
    %s165 = sphi 0, %s164
    %s179 = sphi 0, %s165
    %s185 = sphi 0, %s187
    %s188 = sphi 0, %s185
    %s189 = sphi 0, %s188
    %s205 = sphi 0, %s189
  $region4: #{tpu_custom_call.1} parent=0 // loop_header_branch
    %16 = sbr.rel (%p14) target = $region8
  $region5: #{tpu_custom_call.1} parent=0 // loop_body
    %s18 = ssub.s32 %s13, 1
    %s19 = ssub.s32 %s13, 2
    %s20 = sadd.s32 %s13, 1
    %s21 = ssub.s32 %s13, %s20
    %p22 = scmp.eq.s32.totalorder %s21, 0
    %s24 = sadd.s32 %s23, 1
    %s25 = scalar_select %p22, %s23, %s24
    %p28 = pneg %p22
    %p29 = scmp.eq.s32.totalorder %s13, 1
    %p30 = por %p28, %p29
    %p31 = scmp.ne.s32.totalorder %s23, %s26
    %p32 = scmp.eq.s32.totalorder %s13, 0
    %p33 = por %p31, %p32
    %p34 = scmp.ne.s32.totalorder %s23, %s26
    %p35 = scmp.eq.s32.totalorder %s18, 1
    %p36 = por %p34, %p35
    %p37 = scmp.ne.s32.totalorder %s26, %s27
    %p38 = scmp.eq.s32.totalorder %s18, 0
    %p39 = por %p37, %p38
    %p40 = scmp.ne.s32.totalorder %s26, %s27
    %p41 = scmp.eq.s32.totalorder %s19, 1
    %p42 = por %p40, %p41
    %p44 = scmp.ne.s32.totalorder %s27, %s43
    %p45 = scmp.eq.s32.totalorder %s19, 0
    %p46 = por %p44, %p45
    %s47 = ssub.s32 %s13, %s20
    %p48 = scmp.eq.s32.totalorder %s47, 0
    %s50 = sadd.s32 %s49, 1
    %s51 = scalar_select %p48, %s49, %s50
    %p54 = pneg %p48
    %p55 = scmp.eq.s32.totalorder %s13, 1
    %p56 = por %p54, %p55
    %p57 = scmp.ne.s32.totalorder %s49, %s52
    %p58 = scmp.eq.s32.totalorder %s13, 0
    %p59 = por %p57, %p58
    %p60 = scmp.ne.s32.totalorder %s49, %s52
    %p61 = scmp.eq.s32.totalorder %s18, 1
    %p62 = por %p60, %p61
    %p63 = scmp.ne.s32.totalorder %s52, %s53
    %p64 = scmp.eq.s32.totalorder %s18, 0
    %p65 = por %p63, %p64
    %p66 = scmp.ne.s32.totalorder %s52, %s53
    %p67 = scmp.eq.s32.totalorder %s19, 1
    %p68 = por %p66, %p67
    %p70 = scmp.ne.s32.totalorder %s53, %s69
    %p71 = scmp.eq.s32.totalorder %s19, 0
    %p72 = por %p70, %p71
    %s73 = ssub.s32 %s13, %s20
    %p74 = scmp.eq.s32.totalorder %s73, 0
    %s76 = sadd.s32 %s75, 1
    %s77 = scalar_select %p74, %s75, %s76
    %p80 = pneg %p74
    %p81 = scmp.eq.s32.totalorder %s13, 1
    %p82 = por %p80, %p81
    %p83 = scmp.ne.s32.totalorder %s75, %s78
    %p84 = scmp.eq.s32.totalorder %s13, 0
    %p85 = por %p83, %p84
    %p86 = scmp.ne.s32.totalorder %s75, %s78
    %p87 = scmp.eq.s32.totalorder %s18, 1
    %p88 = por %p86, %p87
    %p89 = scmp.ne.s32.totalorder %s78, %s79
    %p90 = scmp.eq.s32.totalorder %s18, 0
    %p91 = por %p89, %p90
    %p92 = scmp.ne.s32.totalorder %s78, %s79
    %p93 = scmp.eq.s32.totalorder %s19, 1
    %p94 = por %p92, %p93
    %p96 = scmp.ne.s32.totalorder %s79, %s95
    %p97 = scmp.eq.s32.totalorder %s19, 0
    %p98 = por %p96, %p97
    %s100 = sadd.s32 %s99, 1
    %p103 = scmp.eq.s32.totalorder %s13, 1
    %p104 = scmp.ne.s32.totalorder %s99, %s101
    %p105 = scmp.eq.s32.totalorder %s13, 0
    %p106 = por %p104, %p105
    %p107 = scmp.ne.s32.totalorder %s99, %s101
    %p108 = scmp.eq.s32.totalorder %s18, 1
    %p109 = por %p107, %p108
    %p110 = scmp.ne.s32.totalorder %s101, %s102
    %p111 = scmp.eq.s32.totalorder %s18, 0
    %p112 = por %p110, %p111
    %p113 = scmp.ne.s32.totalorder %s101, %s102
    %p114 = scmp.eq.s32.totalorder %s19, 1
    %p115 = por %p113, %p114
    %p117 = scmp.ne.s32.totalorder %s102, %s116
    %p118 = scmp.eq.s32.totalorder %s19, 0
    %p119 = por %p117, %p118
    %s121 = sadd.s32 %s120, 1
    %p124 = scmp.eq.s32.totalorder %s13, 1
    %p125 = scmp.ne.s32.totalorder %s120, %s122
    %p126 = scmp.eq.s32.totalorder %s13, 0
    %p127 = por %p125, %p126
    %p128 = scmp.ne.s32.totalorder %s120, %s122
    %p129 = scmp.eq.s32.totalorder %s18, 1
    %p130 = por %p128, %p129
    %p131 = scmp.ne.s32.totalorder %s122, %s123
    %p132 = scmp.eq.s32.totalorder %s18, 0
    %p133 = por %p131, %p132
    %p134 = scmp.ne.s32.totalorder %s122, %s123
    %p135 = scmp.eq.s32.totalorder %s19, 1
    %p136 = por %p134, %p135
    %p138 = scmp.ne.s32.totalorder %s123, %s137
    %p139 = scmp.eq.s32.totalorder %s19, 0
    %p140 = por %p138, %p139
    %s142 = sadd.s32 %s141, 1
    %p145 = scmp.eq.s32.totalorder %s13, 1
    %p146 = scmp.ne.s32.totalorder %s141, %s143
    %p147 = scmp.eq.s32.totalorder %s13, 0
    %p148 = por %p146, %p147
    %p149 = scmp.ne.s32.totalorder %s141, %s143
    %p150 = scmp.eq.s32.totalorder %s18, 1
    %p151 = por %p149, %p150
    %p152 = scmp.ne.s32.totalorder %s143, %s144
    %p153 = scmp.eq.s32.totalorder %s18, 0
    %p154 = por %p152, %p153
    %p155 = scmp.ne.s32.totalorder %s143, %s144
    %p156 = scmp.eq.s32.totalorder %s19, 1
    %p157 = por %p155, %p156
    %p159 = scmp.ne.s32.totalorder %s144, %s158
    %p160 = scmp.eq.s32.totalorder %s19, 0
    %p161 = por %p159, %p160
    %s163 = sadd.s32 %s162, 1
    %p166 = scmp.eq.s32.totalorder %s13, 1
    %p167 = scmp.ne.s32.totalorder %s162, %s164
    %p168 = scmp.eq.s32.totalorder %s13, 0
    %p169 = por %p167, %p168
    %p170 = scmp.ne.s32.totalorder %s162, %s164
    %p171 = scmp.eq.s32.totalorder %s18, 1
    %p172 = por %p170, %p171
    %p173 = scmp.ne.s32.totalorder %s164, %s165
    %p174 = scmp.eq.s32.totalorder %s18, 0
    %p175 = por %p173, %p174
    %p176 = scmp.ne.s32.totalorder %s164, %s165
    %p177 = scmp.eq.s32.totalorder %s19, 1
    %p178 = por %p176, %p177
    %p180 = scmp.ne.s32.totalorder %s165, %s179
    %p181 = scmp.eq.s32.totalorder %s19, 0
    %p182 = por %p180, %p181
    %s183 = ssub.s32 %s13, %s20
    %p184 = scmp.eq.s32.totalorder %s183, 0
    %s186 = sadd.s32 %s185, 1
    %s187 = scalar_select %p184, %s185, %s186
    %p190 = pneg %p184
    %p191 = scmp.eq.s32.totalorder %s13, 1
    %p192 = por %p190, %p191
    %p193 = scmp.ne.s32.totalorder %s185, %s188
    %p194 = scmp.eq.s32.totalorder %s13, 0
    %p195 = por %p193, %p194
    %p196 = scmp.ne.s32.totalorder %s185, %s188
    %p197 = scmp.eq.s32.totalorder %s18, 1
    %p198 = por %p196, %p197
    %p199 = scmp.ne.s32.totalorder %s188, %s189
    %p200 = scmp.eq.s32.totalorder %s18, 0
    %p201 = por %p199, %p200
    %p202 = scmp.ne.s32.totalorder %s188, %s189
    %p203 = scmp.eq.s32.totalorder %s19, 1
    %p204 = por %p202, %p203
    %p206 = scmp.ne.s32.totalorder %s189, %s205
    %p207 = scmp.eq.s32.totalorder %s19, 0
    %p208 = por %p206, %p207
    %p209 = scmp.le.s32.totalorder 1, %s13
    %p210 = scmp.lt.s32.totalorder %s13, 3
    %p211 = pnand %p209, %p210
    %p212 = pneg %p211
    // Predicated region
    $region9: #{tpu_custom_call.1} parent=5 // pred_check
      _
    $region10: #{tpu_custom_call.1} parent=5 // pred_check_branch
      %214 = sbr.rel (%p211) target = $region12
    $region11: #{tpu_custom_call.1} parent=5 // pred_region
      %s215 = ssub.s32 %s13, 1
      // Predicated region
      $region13: #{tpu_custom_call.1} parent=11 // pred_check
        %p216 = pneg %p112
      $region14: #{tpu_custom_call.1} parent=11 // pred_check_branch
        %218 = sbr.rel (%p216) target = $region16
      $region15: #{tpu_custom_call.1} parent=11 // pred_region
        _
      $region16: #{tpu_custom_call.1} parent=11 // pred_fallthru
        _
      // Predicated region
      $region17: #{tpu_custom_call.1} parent=11 // pred_check
        %p219 = pneg %p133
      $region18: #{tpu_custom_call.1} parent=11 // pred_check_branch
        %221 = sbr.rel (%p219) target = $region20
      $region19: #{tpu_custom_call.1} parent=11 // pred_region
        _
      $region20: #{tpu_custom_call.1} parent=11 // pred_fallthru
        _
      // Predicated region
      $region21: #{tpu_custom_call.1} parent=11 // pred_check
        %p222 = pneg %p154
      $region22: #{tpu_custom_call.1} parent=11 // pred_check_branch
        %224 = sbr.rel (%p222) target = $region24
      $region23: #{tpu_custom_call.1} parent=11 // pred_region
        _
      $region24: #{tpu_custom_call.1} parent=11 // pred_fallthru
        _
      // Predicated region
      $region25: #{tpu_custom_call.1} parent=11 // pred_check
        %p225 = pneg %p175
      $region26: #{tpu_custom_call.1} parent=11 // pred_check_branch
        %227 = sbr.rel (%p225) target = $region28
      $region27: #{tpu_custom_call.1} parent=11 // pred_region
        _
      $region28: #{tpu_custom_call.1} parent=11 // pred_fallthru
        _
    $region12: #{tpu_custom_call.1} parent=5 // pred_fallthru
      _
    %p228 = scmp.lt.s32.totalorder %s13, 2
    // Predicated region
    $region29: #{tpu_custom_call.1} parent=5 // pred_check
      %p229 = pneg %p228
    $region30: #{tpu_custom_call.1} parent=5 // pred_check_branch
      %231 = sbr.rel (%p229) target = $region32
    $region31: #{tpu_custom_call.1} parent=5 // pred_region
      // Predicated region
      $region33: #{tpu_custom_call.1} parent=31 // pred_check
        %p232 = pneg %p33
      $region34: #{tpu_custom_call.1} parent=31 // pred_check_branch
        %234 = sbr.rel (%p232) target = $region36
      $region35: #{tpu_custom_call.1} parent=31 // pred_region
        %p235 = scmp.lt.s32.totalorder %s13, 1
        %s236 = scalar_select %p235, %s13, 1
        %s237 = smul.addr %s236, 16
        %s238 = smul.addr %s237, 8
        %s239 = scalar_lea.vmem %s0, %s238
      $region36: #{tpu_custom_call.1} parent=31 // pred_fallthru
        _
      // Predicated region
      $region37: #{tpu_custom_call.1} parent=31 // pred_check
        %p240 = pneg %p59
      $region38: #{tpu_custom_call.1} parent=31 // pred_check_branch
        %242 = sbr.rel (%p240) target = $region40
      $region39: #{tpu_custom_call.1} parent=31 // pred_region
        %p243 = scmp.lt.s32.totalorder %s13, 1
        %s244 = scalar_select %p243, %s13, 1
        %s245 = smul.addr %s244, 16
        %s246 = smul.addr %s245, 8
        %s247 = scalar_lea.vmem %s1, %s246
      $region40: #{tpu_custom_call.1} parent=31 // pred_fallthru
        _
      // Predicated region
      $region41: #{tpu_custom_call.1} parent=31 // pred_check
        %p248 = pneg %p85
      $region42: #{tpu_custom_call.1} parent=31 // pred_check_branch
        %250 = sbr.rel (%p248) target = $region44
      $region43: #{tpu_custom_call.1} parent=31 // pred_region
        %p251 = scmp.lt.s32.totalorder %s13, 1
        %s252 = scalar_select %p251, %s13, 1
        %s253 = smul.addr %s252, 16
        %s254 = smul.addr %s253, 4
        %s255 = scalar_lea.vmem %s2, %s254
      $region44: #{tpu_custom_call.1} parent=31 // pred_fallthru
        _
    $region32: #{tpu_custom_call.1} parent=5 // pred_fallthru
      _
    %p256 = scmp.le.s32.totalorder 1, %s13
    %p257 = scmp.lt.s32.totalorder %s13, 3
    %p258 = pnand %p256, %p257
    %p259 = pneg %p258
    // Predicated region
    $region45: #{tpu_custom_call.1} parent=5 // pred_check
      _
    $region46: #{tpu_custom_call.1} parent=5 // pred_check_branch
      %261 = sbr.rel (%p258) target = $region48
    $region47: #{tpu_custom_call.1} parent=5 // pred_region
      %s262 = ssub.s32 %s13, 1
      %p263 = scmp.lt.s32.totalorder %s18, 1
      %s264 = scalar_select %p263, %s18, 1
      %s265 = smul.addr %s264, 16
      %s266 = smul.addr %s265, 8
      %s267 = scalar_lea.vmem %s0, %s266
      %p268 = pneg %p39
      %p269 = pneg %p36
      %p270 = scmp.lt.s32.totalorder %s18, 1
      %s271 = scalar_select %p270, %s18, 1
      %s272 = smul.addr %s271, 16
      %s273 = smul.addr %s272, 8
      %s274 = scalar_lea.vmem %s1, %s273
      %p275 = pneg %p65
      %p276 = pneg %p62
      %p277 = scmp.lt.s32.totalorder %s18, 1
      %s278 = scalar_select %p277, %s18, 1
      %s279 = smul.addr %s278, 16
      %s280 = smul.addr %s279, 4
      %s281 = scalar_lea.vmem %s2, %s280
      %p282 = pneg %p91
      %p283 = pneg %p88
      %p284 = pneg %p112
      %p285 = pneg %p109
      %p286 = pneg %p133
      %p287 = pneg %p130
      %p288 = pneg %p154
      %p289 = pneg %p151
      %p290 = pneg %p175
      %p291 = pneg %p172
      %p292 = pneg %p201
      %p293 = pneg %p198
      %p294 = scmp.lt.s32.totalorder %s18, 1
      %s295 = scalar_select %p294, %s18, 1
      %s296 = smul.addr %s295, 16
      %s297 = smul.addr %s296, 8
      %s298 = scalar_lea.vmem %s7, %s297
      %p299 = scmp.lt.s32.totalorder %s18, 1
      %s300 = scalar_select %p299, %s18, 1
      %s301 = smul.addr %s300, 16
      %s302 = smul.addr %s301, 8
      %s303 = scalar_lea.vmem %s0, %s302
      %p304 = scmp.lt.s32.totalorder %s18, 1
      %s305 = scalar_select %p304, %s18, 1
      %s306 = smul.addr %s305, 16
      %s307 = smul.addr %s306, 8
      %s308 = scalar_lea.vmem %s1, %s307
      %p309 = scmp.lt.s32.totalorder %s18, 1
      %s310 = scalar_select %p309, %s18, 1
      %s311 = smul.addr %s310, 16
      %s312 = smul.addr %s311, 4
      %s313 = scalar_lea.vmem %s2, %s312
      %p314 = scmp.lt.s32.totalorder %s18, 1
      %s315 = scalar_select %p314, %s18, 1
      %s316 = smul.addr %s315, 16
      %s317 = smul.addr %s316, 8
      %s318 = scalar_lea.vmem %s7, %s317
      %v319 = vld [vmem:[%s3] sm:$0xff]
      %v320 = vld [vmem:[%s3 + $0x8] sm:$0xff]
      %v321 = vld [vmem:[%s3 + $0x10] sm:$0xff]
      %v322 = vld [vmem:[%s3 + $0x18] sm:$0xff]
      %v323 = vld [vmem:[%s4] sm:$0x1]
      %v324 = vld [vmem:[%s5] sm:$0x1]
      %v325 = vld [vmem:[%s6] sm:$0x1]
      %v326 = vld [vmem:[%s313] sm:$0xf]
      %v327 = vld [vmem:[%s313 + $0x4] sm:$0xf]
      %v328 = vld [vmem:[%s313 + $0x8] sm:$0xf]
      %v329 = vld [vmem:[%s313 + $0xc] sm:$0xf]
      %v330 = vld [vmem:[%s313 + $0x10] sm:$0xf]
      %v331 = vld [vmem:[%s313 + $0x14] sm:$0xf]
      %v332 = vld [vmem:[%s313 + $0x18] sm:$0xf]
      %v333 = vld [vmem:[%s313 + $0x1c] sm:$0xf]
      %v334 = vld [vmem:[%s313 + $0x20] sm:$0xf]
      %v335 = vld [vmem:[%s313 + $0x24] sm:$0xf]
      %v336 = vld [vmem:[%s313 + $0x28] sm:$0xf]
      %v337 = vld [vmem:[%s313 + $0x2c] sm:$0xf]
      %v338 = vld [vmem:[%s313 + $0x30] sm:$0xf]
      %v339 = vld [vmem:[%s313 + $0x34] sm:$0xf]
      %v340 = vld [vmem:[%s313 + $0x38] sm:$0xf]
      %v341 = vld [vmem:[%s313 + $0x3c] sm:$0xf]
      %v342 = vunpack.c.l.bf16 %v326
      %v343 = vunpack.c.l.bf16 %v327
      %v344 = vunpack.c.l.bf16 %v328
      %v345 = vunpack.c.l.bf16 %v329
      %v346 = vunpack.c.l.bf16 %v330
      %v347 = vunpack.c.l.bf16 %v331
      %v348 = vunpack.c.l.bf16 %v332
      %v349 = vunpack.c.l.bf16 %v333
      %v350 = vunpack.c.l.bf16 %v334
      %v351 = vunpack.c.l.bf16 %v335
      %v352 = vunpack.c.l.bf16 %v336
      %v353 = vunpack.c.l.bf16 %v337
      %v354 = vunpack.c.l.bf16 %v338
      %v355 = vunpack.c.l.bf16 %v339
      %v356 = vunpack.c.l.bf16 %v340
      %v357 = vunpack.c.l.bf16 %v341
      %358 = vmax.xlane.f32.xlu0 %v342
      %v359 = vpop.xlane.xlu0 %358
      %360 = vmax.xlane.f32.xlu0 %v343
      %v361 = vpop.xlane.xlu0 %360
      %362 = vmax.xlane.f32.xlu0 %v344
      %v363 = vpop.xlane.xlu0 %362
      %364 = vmax.xlane.f32.xlu0 %v345
      %v365 = vpop.xlane.xlu0 %364
      %366 = vmax.xlane.f32.xlu0 %v346
      %v367 = vpop.xlane.xlu0 %366
      %368 = vmax.xlane.f32.xlu0 %v347
      %v369 = vpop.xlane.xlu0 %368
      %370 = vmax.xlane.f32.xlu0 %v348
      %v371 = vpop.xlane.xlu0 %370
      %372 = vmax.xlane.f32.xlu0 %v349
      %v373 = vpop.xlane.xlu0 %372
      %374 = vmax.xlane.f32.xlu0 %v350
      %v375 = vpop.xlane.xlu0 %374
      %376 = vmax.xlane.f32.xlu0 %v351
      %v377 = vpop.xlane.xlu0 %376
      %378 = vmax.xlane.f32.xlu0 %v352
      %v379 = vpop.xlane.xlu0 %378
      %380 = vmax.xlane.f32.xlu0 %v353
      %v381 = vpop.xlane.xlu0 %380
      %382 = vmax.xlane.f32.xlu0 %v354
      %v383 = vpop.xlane.xlu0 %382
      %384 = vmax.xlane.f32.xlu0 %v355
      %v385 = vpop.xlane.xlu0 %384
      %386 = vmax.xlane.f32.xlu0 %v356
      %v387 = vpop.xlane.xlu0 %386
      %388 = vmax.xlane.f32.xlu0 %v357
      %v389 = vpop.xlane.xlu0 %388
      %v390 = vsub.f32 %v342, %v359
      %v391 = vsub.f32 %v343, %v361
      %v392 = vsub.f32 %v344, %v363
      %v393 = vsub.f32 %v345, %v365
      %v394 = vsub.f32 %v346, %v367
      %v395 = vsub.f32 %v347, %v369
      %v396 = vsub.f32 %v348, %v371
      %v397 = vsub.f32 %v349, %v373
      %v398 = vsub.f32 %v350, %v375
      %v399 = vsub.f32 %v351, %v377
      %v400 = vsub.f32 %v352, %v379
      %v401 = vsub.f32 %v353, %v381
      %v402 = vsub.f32 %v354, %v383
      %v403 = vsub.f32 %v355, %v385
      %v404 = vsub.f32 %v356, %v387
      %v405 = vsub.f32 %v357, %v389
      %v406 = vmul.f32 %v390, 1.442695
      %v407 = vpow.pop %v406
      %v408 = vmul.f32 %v391, 1.442695
      %v409 = vpow.pop %v408
      %v410 = vmul.f32 %v392, 1.442695
      %v411 = vpow.pop %v410
      %v412 = vmul.f32 %v393, 1.442695
      %v413 = vpow.pop %v412
      %v414 = vmul.f32 %v394, 1.442695
      %v415 = vpow.pop %v414
      %v416 = vmul.f32 %v395, 1.442695
      %v417 = vpow.pop %v416
      %v418 = vmul.f32 %v396, 1.442695
      %v419 = vpow.pop %v418
      %v420 = vmul.f32 %v397, 1.442695
      %v421 = vpow.pop %v420
      %v422 = vmul.f32 %v398, 1.442695
      %v423 = vpow.pop %v422
      %v424 = vmul.f32 %v399, 1.442695
      %v425 = vpow.pop %v424
      %v426 = vmul.f32 %v400, 1.442695
      %v427 = vpow.pop %v426
      %v428 = vmul.f32 %v401, 1.442695
      %v429 = vpow.pop %v428
      %v430 = vmul.f32 %v402, 1.442695
      %v431 = vpow.pop %v430
      %v432 = vmul.f32 %v403, 1.442695
      %v433 = vpow.pop %v432
      %v434 = vmul.f32 %v404, 1.442695
      %v435 = vpow.pop %v434
      %v436 = vmul.f32 %v405, 1.442695
      %v437 = vpow.pop %v436
      %438 = vadd.xlane.f32.xlu0 %v407
      %v439 = vpop.xlane.xlu0 %438
      %440 = vadd.xlane.f32.xlu0 %v409
      %v441 = vpop.xlane.xlu0 %440
      %442 = vadd.xlane.f32.xlu0 %v411
      %v443 = vpop.xlane.xlu0 %442
      %444 = vadd.xlane.f32.xlu0 %v413
      %v445 = vpop.xlane.xlu0 %444
      %446 = vadd.xlane.f32.xlu0 %v415
      %v447 = vpop.xlane.xlu0 %446
      %448 = vadd.xlane.f32.xlu0 %v417
      %v449 = vpop.xlane.xlu0 %448
      %450 = vadd.xlane.f32.xlu0 %v419
      %v451 = vpop.xlane.xlu0 %450
      %452 = vadd.xlane.f32.xlu0 %v421
      %v453 = vpop.xlane.xlu0 %452
      %454 = vadd.xlane.f32.xlu0 %v423
      %v455 = vpop.xlane.xlu0 %454
      %456 = vadd.xlane.f32.xlu0 %v425
      %v457 = vpop.xlane.xlu0 %456
      %458 = vadd.xlane.f32.xlu0 %v427
      %v459 = vpop.xlane.xlu0 %458
      %460 = vadd.xlane.f32.xlu0 %v429
      %v461 = vpop.xlane.xlu0 %460
      %462 = vadd.xlane.f32.xlu0 %v431
      %v463 = vpop.xlane.xlu0 %462
      %464 = vadd.xlane.f32.xlu0 %v433
      %v465 = vpop.xlane.xlu0 %464
      %466 = vadd.xlane.f32.xlu0 %v435
      %v467 = vpop.xlane.xlu0 %466
      %468 = vadd.xlane.f32.xlu0 %v437
      %v469 = vpop.xlane.xlu0 %468
      %v470 = vrcp.pop %v439
      %v471 = vrcp.pop %v441
      %v472 = vrcp.pop %v443
      %v473 = vrcp.pop %v445
      %v474 = vrcp.pop %v447
      %v475 = vrcp.pop %v449
      %v476 = vrcp.pop %v451
      %v477 = vrcp.pop %v453
      %v478 = vrcp.pop %v455
      %v479 = vrcp.pop %v457
      %v480 = vrcp.pop %v459
      %v481 = vrcp.pop %v461
      %v482 = vrcp.pop %v463
      %v483 = vrcp.pop %v465
      %v484 = vrcp.pop %v467
      %v485 = vrcp.pop %v469
      %v486 = vmul.f32 %v407, %v470
      %v487 = vmul.f32 %v409, %v471
      %v488 = vmul.f32 %v411, %v472
      %v489 = vmul.f32 %v413, %v473
      %v490 = vmul.f32 %v415, %v474
      %v491 = vmul.f32 %v417, %v475
      %v492 = vmul.f32 %v419, %v476
      %v493 = vmul.f32 %v421, %v477
      %v494 = vmul.f32 %v423, %v478
      %v495 = vmul.f32 %v425, %v479
      %v496 = vmul.f32 %v427, %v480
      %v497 = vmul.f32 %v429, %v481
      %v498 = vmul.f32 %v431, %v482
      %v499 = vmul.f32 %v433, %v483
      %v500 = vmul.f32 %v435, %v484
      %v501 = vmul.f32 %v437, %v485
      %v502 = vld [vmem:[%s303] sm:$0xff]
      %v503 = vld [vmem:[%s303 + $0x8] sm:$0xff]
      %v504 = vld [vmem:[%s303 + $0x10] sm:$0xff]
      %v505 = vld [vmem:[%s303 + $0x18] sm:$0xff]
      %v506 = vld [vmem:[%s303 + $0x20] sm:$0xff]
      %v507 = vld [vmem:[%s303 + $0x28] sm:$0xff]
      %v508 = vld [vmem:[%s303 + $0x30] sm:$0xff]
      %v509 = vld [vmem:[%s303 + $0x38] sm:$0xff]
      %v510 = vld [vmem:[%s303 + $0x40] sm:$0xff]
      %v511 = vld [vmem:[%s303 + $0x48] sm:$0xff]
      %v512 = vld [vmem:[%s303 + $0x50] sm:$0xff]
      %v513 = vld [vmem:[%s303 + $0x58] sm:$0xff]
      %v514 = vld [vmem:[%s303 + $0x60] sm:$0xff]
      %v515 = vld [vmem:[%s303 + $0x68] sm:$0xff]
      %v516 = vld [vmem:[%s303 + $0x70] sm:$0xff]
      %v517 = vld [vmem:[%s303 + $0x78] sm:$0xff]
      %518 = vmatprep.subr.mxu0 0.0
      %519 = vmatpush1.msra.mxu0 %v502
      %520 = vmatprep.subr.mxu0 0.0
      %521 = vmatpush1.msra.mxu0 %v503
      %522 = vmatprep.subr.mxu0 0.0
      %523 = vmatpush1.msra.mxu0 %v504
      %524 = vmatprep.subr.mxu0 0.0
      %525 = vmatpush1.msra.mxu0 %v505
      %526 = vmatprep.subr.mxu0 0.0
      %527 = vmatpush1.msra.mxu0 %v506
      %528 = vmatprep.subr.mxu0 0.0
      %529 = vmatpush1.msra.mxu0 %v507
      %530 = vmatprep.subr.mxu0 0.0
      %531 = vmatpush1.msra.mxu0 %v508
      %532 = vmatprep.subr.mxu0 0.0
      %533 = vmatpush1.msra.mxu0 %v509
      %534 = vmatprep.subr.mxu0 0.0
      %535 = vmatpush1.msra.mxu0 %v510
      %536 = vmatprep.subr.mxu0 0.0
      %537 = vmatpush1.msra.mxu0 %v511
      %538 = vmatprep.subr.mxu0 0.0
      %539 = vmatpush1.msra.mxu0 %v512
      %540 = vmatprep.subr.mxu0 0.0
      %541 = vmatpush1.msra.mxu0 %v513
      %542 = vmatprep.subr.mxu0 0.0
      %543 = vmatpush1.msra.mxu0 %v514
      %544 = vmatprep.subr.mxu0 0.0
      %545 = vmatpush1.msra.mxu0 %v515
      %546 = vmatprep.subr.mxu0 0.0
      %547 = vmatpush1.msra.mxu0 %v516
      %548 = vmatprep.subr.mxu0 0.0
      %549 = vmatpush1.msra.mxu0 %v517
      %550 = vmatprep.subr.mxu0 0.0
      %551 = vmatpush1.msra.mxu0 0.0
      %552 = vmatprep.subr.mxu0 0.0
      %553 = vmatpush1.msra.mxu0 0.0
      %554 = vmatprep.subr.mxu0 0.0
      %555 = vmatpush1.msra.mxu0 0.0
      %556 = vmatprep.subr.mxu0 0.0
      %557 = vmatpush1.msra.mxu0 0.0
      %558 = vmatprep.subr.mxu0 0.0
      %559 = vmatpush1.msra.mxu0 0.0
      %560 = vmatprep.subr.mxu0 0.0
      %561 = vmatpush1.msra.mxu0 0.0
      %562 = vmatprep.subr.mxu0 0.0
      %563 = vmatpush1.msra.mxu0 0.0
      %564 = vmatprep.subr.mxu0 0.0
      %565 = vmatpush1.msra.mxu0 0.0
      %566 = vmatprep.subr.mxu0 0.0
      %567 = vmatpush1.msra.mxu0 0.0
      %568 = vmatprep.subr.mxu0 0.0
      %569 = vmatpush1.msra.mxu0 0.0
      %570 = vmatprep.subr.mxu0 0.0
      %571 = vmatpush1.msra.mxu0 0.0
      %572 = vmatprep.subr.mxu0 0.0
      %573 = vmatpush1.msra.mxu0 0.0
      %574 = vmatprep.subr.mxu0 0.0
      %575 = vmatpush1.msra.mxu0 0.0
      %576 = vmatprep.subr.mxu0 0.0
      %577 = vmatpush1.msra.mxu0 0.0
      %578 = vmatprep.subr.mxu0 0.0
      %579 = vmatpush1.msra.mxu0 0.0
      %580 = vmatprep.subr.mxu0 0.0
      %581 = vmatpush1.msra.mxu0 0.0
      %582 = vmatprep.mubr.f32.mxu0 0.0
      %583 = vmatmul.mubr.f32.gmra.mrb[0].mxu0 %v486
      %v584 = vpop.f32.mrb[0].mxu0
      %v585 = vadd.f32 0.0, %v584
      %v586 = vpop.f32.mrb[0].mxu0
      %587 = vmatprep.mubr.f32.mxu0 0.0
      %588 = vmatmul.mubr.f32.gmra.mrb[0].mxu0 %v487
      %v589 = vpop.f32.mrb[0].mxu0
      %v590 = vadd.f32 0.0, %v589
      %v591 = vpop.f32.mrb[0].mxu0
      %592 = vmatprep.mubr.f32.mxu0 0.0
      %593 = vmatmul.mubr.f32.gmra.mrb[0].mxu0 %v488
      %v594 = vpop.f32.mrb[0].mxu0
      %v595 = vadd.f32 0.0, %v594
      %v596 = vpop.f32.mrb[0].mxu0
      %597 = vmatprep.mubr.f32.mxu0 0.0
      %598 = vmatmul.mubr.f32.gmra.mrb[0].mxu0 %v489
      %v599 = vpop.f32.mrb[0].mxu0
      %v600 = vadd.f32 0.0, %v599
      %v601 = vpop.f32.mrb[0].mxu0
      %602 = vmatprep.mubr.f32.mxu0 0.0
      %603 = vmatmul.mubr.f32.gmra.mrb[0].mxu0 %v490
      %v604 = vpop.f32.mrb[0].mxu0
      %v605 = vadd.f32 0.0, %v604
      %v606 = vpop.f32.mrb[0].mxu0
      %607 = vmatprep.mubr.f32.mxu0 0.0
      %608 = vmatmul.mubr.f32.gmra.mrb[0].mxu0 %v491
      %v609 = vpop.f32.mrb[0].mxu0
      %v610 = vadd.f32 0.0, %v609
      %v611 = vpop.f32.mrb[0].mxu0
      %612 = vmatprep.mubr.f32.mxu0 0.0
      %613 = vmatmul.mubr.f32.gmra.mrb[0].mxu0 %v492
      %v614 = vpop.f32.mrb[0].mxu0
      %v615 = vadd.f32 0.0, %v614
      %v616 = vpop.f32.mrb[0].mxu0
      %617 = vmatprep.mubr.f32.mxu0 0.0
      %618 = vmatmul.mubr.f32.gmra.mrb[0].mxu0 %v493
      %v619 = vpop.f32.mrb[0].mxu0
      %v620 = vadd.f32 0.0, %v619
      %v621 = vpop.f32.mrb[0].mxu0
      %622 = vmatprep.mubr.f32.mxu0 0.0
      %623 = vmatmul.mubr.f32.gmra.mrb[0].mxu0 %v494
      %v624 = vpop.f32.mrb[0].mxu0
      %v625 = vadd.f32 0.0, %v624
      %v626 = vpop.f32.mrb[0].mxu0
      %627 = vmatprep.mubr.f32.mxu0 0.0
      %628 = vmatmul.mubr.f32.gmra.mrb[0].mxu0 %v495
      %v629 = vpop.f32.mrb[0].mxu0
      %v630 = vadd.f32 0.0, %v629
      %v631 = vpop.f32.mrb[0].mxu0
      %632 = vmatprep.mubr.f32.mxu0 0.0
      %633 = vmatmul.mubr.f32.gmra.mrb[0].mxu0 %v496
      %v634 = vpop.f32.mrb[0].mxu0
      %v635 = vadd.f32 0.0, %v634
      %v636 = vpop.f32.mrb[0].mxu0
      %637 = vmatprep.mubr.f32.mxu0 0.0
      %638 = vmatmul.mubr.f32.gmra.mrb[0].mxu0 %v497
      %v639 = vpop.f32.mrb[0].mxu0
      %v640 = vadd.f32 0.0, %v639
      %v641 = vpop.f32.mrb[0].mxu0
      %642 = vmatprep.mubr.f32.mxu0 0.0
      %643 = vmatmul.mubr.f32.gmra.mrb[0].mxu0 %v498
      %v644 = vpop.f32.mrb[0].mxu0
      %v645 = vadd.f32 0.0, %v644
      %v646 = vpop.f32.mrb[0].mxu0
      %647 = vmatprep.mubr.f32.mxu0 0.0
      %648 = vmatmul.mubr.f32.gmra.mrb[0].mxu0 %v499
      %v649 = vpop.f32.mrb[0].mxu0
      %v650 = vadd.f32 0.0, %v649
      %v651 = vpop.f32.mrb[0].mxu0
      %652 = vmatprep.mubr.f32.mxu0 0.0
      %653 = vmatmul.mubr.f32.gmra.mrb[0].mxu0 %v500
      %v654 = vpop.f32.mrb[0].mxu0
      %v655 = vadd.f32 0.0, %v654
      %v656 = vpop.f32.mrb[0].mxu0
      %657 = vmatprep.mubr.f32.mxu0 0.0
      %658 = vmatmul.mubr.f32.gmra.mrb[0].mxu0 %v501
      %v659 = vpop.f32.mrb[0].mxu0
      %v660 = vadd.f32 0.0, %v659
      %v661 = vpop.f32.mrb[0].mxu0
      %662 = vdwg.mxu0
      %v664 = vlaneseq
      %v665 = vshrl.u32 %v664, 7
      %v666 = vsub.s32 0, %v665
      %v667 = vrot.slane %v323, %v666
      %vm669 = vcmask 261120
      %v671 = vsel %vm669, %v585, 0
      %v674 = vsel %vm669, %v590, 0
      %v677 = vsel %vm669, %v595, 0
      %v680 = vsel %vm669, %v600, 0
      %v683 = vsel %vm669, %v605, 0
      %v686 = vsel %vm669, %v610, 0
      %v689 = vsel %vm669, %v615, 0
      %v692 = vsel %vm669, %v620, 0
      %v695 = vsel %vm669, %v625, 0
      %v698 = vsel %vm669, %v630, 0
      %v701 = vsel %vm669, %v635, 0
      %v704 = vsel %vm669, %v640, 0
      %v707 = vsel %vm669, %v645, 0
      %v710 = vsel %vm669, %v650, 0
      %v713 = vsel %vm669, %v655, 0
      %v716 = vsel %vm669, %v660, 0
      %718 = vmatprep.subr.mxu0 0.0
      %719 = vmatpush1.msra.mxu0 %v319
      %720 = vmatprep.subr.mxu0 0.0
      %721 = vmatpush1.msra.mxu0 %v320
      %722 = vmatprep.subr.mxu0 0.0
      %723 = vmatpush1.msra.mxu0 %v321
      %724 = vmatprep.subr.mxu0 0.0
      %725 = vmatpush1.msra.mxu0 %v322
      %726 = vmatprep.subr.mxu0 0.0
      %727 = vmatpush1.msra.mxu0 0.0
      %728 = vmatprep.subr.mxu0 0.0
      %729 = vmatpush1.msra.mxu0 0.0
      %730 = vmatprep.subr.mxu0 0.0
      %731 = vmatpush1.msra.mxu0 0.0
      %732 = vmatprep.subr.mxu0 0.0
      %733 = vmatpush1.msra.mxu0 0.0
      %734 = vmatprep.subr.mxu0 0.0
      %735 = vmatpush1.msra.mxu0 0.0
      %736 = vmatprep.subr.mxu0 0.0
      %737 = vmatpush1.msra.mxu0 0.0
      %738 = vmatprep.subr.mxu0 0.0
      %739 = vmatpush1.msra.mxu0 0.0
      %740 = vmatprep.subr.mxu0 0.0
      %741 = vmatpush1.msra.mxu0 0.0
      %742 = vmatprep.subr.mxu0 0.0
      %743 = vmatpush1.msra.mxu0 0.0
      %744 = vmatprep.subr.mxu0 0.0
      %745 = vmatpush1.msra.mxu0 0.0
      %746 = vmatprep.subr.mxu0 0.0
      %747 = vmatpush1.msra.mxu0 0.0
      %748 = vmatprep.subr.mxu0 0.0
      %749 = vmatpush1.msra.mxu0 0.0
      %750 = vmatprep.subr.mxu0 0.0
      %751 = vmatpush1.msra.mxu0 0.0
      %752 = vmatprep.subr.mxu0 0.0
      %753 = vmatpush1.msra.mxu0 0.0
      %754 = vmatprep.subr.mxu0 0.0
      %755 = vmatpush1.msra.mxu0 0.0
      %756 = vmatprep.subr.mxu0 0.0
      %757 = vmatpush1.msra.mxu0 0.0
      %758 = vmatprep.subr.mxu0 0.0
      %759 = vmatpush1.msra.mxu0 0.0
      %760 = vmatprep.subr.mxu0 0.0
      %761 = vmatpush1.msra.mxu0 0.0
      %762 = vmatprep.subr.mxu0 0.0
      %763 = vmatpush1.msra.mxu0 0.0
      %764 = vmatprep.subr.mxu0 0.0
      %765 = vmatpush1.msra.mxu0 0.0
      %766 = vmatprep.subr.mxu0 0.0
      %767 = vmatpush1.msra.mxu0 0.0
      %768 = vmatprep.subr.mxu0 0.0
      %769 = vmatpush1.msra.mxu0 0.0
      %770 = vmatprep.subr.mxu0 0.0
      %771 = vmatpush1.msra.mxu0 0.0
      %772 = vmatprep.subr.mxu0 0.0
      %773 = vmatpush1.msra.mxu0 0.0
      %774 = vmatprep.subr.mxu0 0.0
      %775 = vmatpush1.msra.mxu0 0.0
      %776 = vmatprep.subr.mxu0 0.0
      %777 = vmatpush1.msra.mxu0 0.0
      %778 = vmatprep.subr.mxu0 0.0
      %779 = vmatpush1.msra.mxu0 0.0
      %780 = vmatprep.subr.mxu0 0.0
      %781 = vmatpush1.msra.mxu0 0.0
      %782 = vmatprep.mubr.f32.mxu0 0.0
      %783 = vmatmul.mubr.f32.gmra.mrb[0].mxu0 %v671
      %v784 = vpop.f32.mrb[0].mxu0
      %v785 = vadd.f32 %v667, %v784
      %v786 = vpop.f32.mrb[0].mxu0
      %787 = vmatprep.mubr.f32.mxu0 0.0
      %788 = vmatmul.mubr.f32.gmra.mrb[0].mxu0 %v674
      %v789 = vpop.f32.mrb[0].mxu0
      %v790 = vadd.f32 %v667, %v789
      %v791 = vpop.f32.mrb[0].mxu0
      %792 = vmatprep.mubr.f32.mxu0 0.0
      %793 = vmatmul.mubr.f32.gmra.mrb[0].mxu0 %v677
      %v794 = vpop.f32.mrb[0].mxu0
      %v795 = vadd.f32 %v667, %v794
      %v796 = vpop.f32.mrb[0].mxu0
      %797 = vmatprep.mubr.f32.mxu0 0.0
      %798 = vmatmul.mubr.f32.gmra.mrb[0].mxu0 %v680
      %v799 = vpop.f32.mrb[0].mxu0
      %v800 = vadd.f32 %v667, %v799
      %v801 = vpop.f32.mrb[0].mxu0
      %802 = vmatprep.mubr.f32.mxu0 0.0
      %803 = vmatmul.mubr.f32.gmra.mrb[0].mxu0 %v683
      %v804 = vpop.f32.mrb[0].mxu0
      %v805 = vadd.f32 %v667, %v804
      %v806 = vpop.f32.mrb[0].mxu0
      %807 = vmatprep.mubr.f32.mxu0 0.0
      %808 = vmatmul.mubr.f32.gmra.mrb[0].mxu0 %v686
      %v809 = vpop.f32.mrb[0].mxu0
      %v810 = vadd.f32 %v667, %v809
      %v811 = vpop.f32.mrb[0].mxu0
      %812 = vmatprep.mubr.f32.mxu0 0.0
      %813 = vmatmul.mubr.f32.gmra.mrb[0].mxu0 %v689
      %v814 = vpop.f32.mrb[0].mxu0
      %v815 = vadd.f32 %v667, %v814
      %v816 = vpop.f32.mrb[0].mxu0
      %817 = vmatprep.mubr.f32.mxu0 0.0
      %818 = vmatmul.mubr.f32.gmra.mrb[0].mxu0 %v692
      %v819 = vpop.f32.mrb[0].mxu0
      %v820 = vadd.f32 %v667, %v819
      %v821 = vpop.f32.mrb[0].mxu0
      %822 = vmatprep.mubr.f32.mxu0 0.0
      %823 = vmatmul.mubr.f32.gmra.mrb[0].mxu0 %v695
      %v824 = vpop.f32.mrb[0].mxu0
      %v825 = vadd.f32 %v667, %v824
      %v826 = vpop.f32.mrb[0].mxu0
      %827 = vmatprep.mubr.f32.mxu0 0.0
      %828 = vmatmul.mubr.f32.gmra.mrb[0].mxu0 %v698
      %v829 = vpop.f32.mrb[0].mxu0
      %v830 = vadd.f32 %v667, %v829
      %v831 = vpop.f32.mrb[0].mxu0
      %832 = vmatprep.mubr.f32.mxu0 0.0
      %833 = vmatmul.mubr.f32.gmra.mrb[0].mxu0 %v701
      %v834 = vpop.f32.mrb[0].mxu0
      %v835 = vadd.f32 %v667, %v834
      %v836 = vpop.f32.mrb[0].mxu0
      %837 = vmatprep.mubr.f32.mxu0 0.0
      %838 = vmatmul.mubr.f32.gmra.mrb[0].mxu0 %v704
      %v839 = vpop.f32.mrb[0].mxu0
      %v840 = vadd.f32 %v667, %v839
      %v841 = vpop.f32.mrb[0].mxu0
      %842 = vmatprep.mubr.f32.mxu0 0.0
      %843 = vmatmul.mubr.f32.gmra.mrb[0].mxu0 %v707
      %v844 = vpop.f32.mrb[0].mxu0
      %v845 = vadd.f32 %v667, %v844
      %v846 = vpop.f32.mrb[0].mxu0
      %847 = vmatprep.mubr.f32.mxu0 0.0
      %848 = vmatmul.mubr.f32.gmra.mrb[0].mxu0 %v710
      %v849 = vpop.f32.mrb[0].mxu0
      %v850 = vadd.f32 %v667, %v849
      %v851 = vpop.f32.mrb[0].mxu0
      %852 = vmatprep.mubr.f32.mxu0 0.0
      %853 = vmatmul.mubr.f32.gmra.mrb[0].mxu0 %v713
      %v854 = vpop.f32.mrb[0].mxu0
      %v855 = vadd.f32 %v667, %v854
      %v856 = vpop.f32.mrb[0].mxu0
      %857 = vmatprep.mubr.f32.mxu0 0.0
      %858 = vmatmul.mubr.f32.gmra.mrb[0].mxu0 %v716
      %v859 = vpop.f32.mrb[0].mxu0
      %v860 = vadd.f32 %v667, %v859
      %v861 = vpop.f32.mrb[0].mxu0
      %862 = vdwg.mxu0
      %v863 = vld [vmem:[%s308] sm:$0xff]
      %v864 = vld [vmem:[%s308 + $0x8] sm:$0xff]
      %v865 = vld [vmem:[%s308 + $0x10] sm:$0xff]
      %v866 = vld [vmem:[%s308 + $0x18] sm:$0xff]
      %v867 = vld [vmem:[%s308 + $0x20] sm:$0xff]
      %v868 = vld [vmem:[%s308 + $0x28] sm:$0xff]
      %v869 = vld [vmem:[%s308 + $0x30] sm:$0xff]
      %v870 = vld [vmem:[%s308 + $0x38] sm:$0xff]
      %v871 = vld [vmem:[%s308 + $0x40] sm:$0xff]
      %v872 = vld [vmem:[%s308 + $0x48] sm:$0xff]
      %v873 = vld [vmem:[%s308 + $0x50] sm:$0xff]
      %v874 = vld [vmem:[%s308 + $0x58] sm:$0xff]
      %v875 = vld [vmem:[%s308 + $0x60] sm:$0xff]
      %v876 = vld [vmem:[%s308 + $0x68] sm:$0xff]
      %v877 = vld [vmem:[%s308 + $0x70] sm:$0xff]
      %v878 = vld [vmem:[%s308 + $0x78] sm:$0xff]
      %v879 = vadd.f32 %v785, %v863
      %v880 = vadd.f32 %v790, %v864
      %v881 = vadd.f32 %v795, %v865
      %v882 = vadd.f32 %v800, %v866
      %v883 = vadd.f32 %v805, %v867
      %v884 = vadd.f32 %v810, %v868
      %v885 = vadd.f32 %v815, %v869
      %v886 = vadd.f32 %v820, %v870
      %v887 = vadd.f32 %v825, %v871
      %v888 = vadd.f32 %v830, %v872
      %v889 = vadd.f32 %v835, %v873
      %v890 = vadd.f32 %v840, %v874
      %v891 = vadd.f32 %v845, %v875
      %v892 = vadd.f32 %v850, %v876
      %v893 = vadd.f32 %v855, %v877
      %v894 = vadd.f32 %v860, %v878
      %v895 = vsel %vm669, %v879, 0.0
      %896 = vadd.xlane.f32.xlu0 %v895
      %v897 = vpop.xlane.xlu0 %896
      %v898 = vsel %vm669, %v880, 0.0
      %899 = vadd.xlane.f32.xlu0 %v898
      %v900 = vpop.xlane.xlu0 %899
      %v901 = vsel %vm669, %v881, 0.0
      %902 = vadd.xlane.f32.xlu0 %v901
      %v903 = vpop.xlane.xlu0 %902
      %v904 = vsel %vm669, %v882, 0.0
      %905 = vadd.xlane.f32.xlu0 %v904
      %v906 = vpop.xlane.xlu0 %905
      %v907 = vsel %vm669, %v883, 0.0
      %908 = vadd.xlane.f32.xlu0 %v907
      %v909 = vpop.xlane.xlu0 %908
      %v910 = vsel %vm669, %v884, 0.0
      %911 = vadd.xlane.f32.xlu0 %v910
      %v912 = vpop.xlane.xlu0 %911
      %v913 = vsel %vm669, %v885, 0.0
      %914 = vadd.xlane.f32.xlu0 %v913
      %v915 = vpop.xlane.xlu0 %914
      %v916 = vsel %vm669, %v886, 0.0
      %917 = vadd.xlane.f32.xlu0 %v916
      %v918 = vpop.xlane.xlu0 %917
      %v919 = vsel %vm669, %v887, 0.0
      %920 = vadd.xlane.f32.xlu0 %v919
      %v921 = vpop.xlane.xlu0 %920
      %v922 = vsel %vm669, %v888, 0.0
      %923 = vadd.xlane.f32.xlu0 %v922
      %v924 = vpop.xlane.xlu0 %923
      %v925 = vsel %vm669, %v889, 0.0
      %926 = vadd.xlane.f32.xlu0 %v925
      %v927 = vpop.xlane.xlu0 %926
      %v928 = vsel %vm669, %v890, 0.0
      %929 = vadd.xlane.f32.xlu0 %v928
      %v930 = vpop.xlane.xlu0 %929
      %v931 = vsel %vm669, %v891, 0.0
      %932 = vadd.xlane.f32.xlu0 %v931
      %v933 = vpop.xlane.xlu0 %932
      %v934 = vsel %vm669, %v892, 0.0
      %935 = vadd.xlane.f32.xlu0 %v934
      %v936 = vpop.xlane.xlu0 %935
      %v937 = vsel %vm669, %v893, 0.0
      %938 = vadd.xlane.f32.xlu0 %v937
      %v939 = vpop.xlane.xlu0 %938
      %v940 = vsel %vm669, %v894, 0.0
      %941 = vadd.xlane.f32.xlu0 %v940
      %v942 = vpop.xlane.xlu0 %941
      %v943 = vrcp.pop 32.0
      %v944 = vmul.f32 %v897, %v943
      %v945 = vmul.f32 %v900, %v943
      %v946 = vmul.f32 %v903, %v943
      %v947 = vmul.f32 %v906, %v943
      %v948 = vmul.f32 %v909, %v943
      %v949 = vmul.f32 %v912, %v943
      %v950 = vmul.f32 %v915, %v943
      %v951 = vmul.f32 %v918, %v943
      %v952 = vmul.f32 %v921, %v943
      %v953 = vmul.f32 %v924, %v943
      %v954 = vmul.f32 %v927, %v943
      %v955 = vmul.f32 %v930, %v943
      %v956 = vmul.f32 %v933, %v943
      %v957 = vmul.f32 %v936, %v943
      %v958 = vmul.f32 %v939, %v943
      %v959 = vmul.f32 %v942, %v943
      %v960 = vsub.f32 %v879, %v944
      %v961 = vsub.f32 %v880, %v945
      %v962 = vsub.f32 %v881, %v946
      %v963 = vsub.f32 %v882, %v947
      %v964 = vsub.f32 %v883, %v948
      %v965 = vsub.f32 %v884, %v949
      %v966 = vsub.f32 %v885, %v950
      %v967 = vsub.f32 %v886, %v951
      %v968 = vsub.f32 %v887, %v952
      %v969 = vsub.f32 %v888, %v953
      %v970 = vsub.f32 %v889, %v954
      %v971 = vsub.f32 %v890, %v955
      %v972 = vsub.f32 %v891, %v956
      %v973 = vsub.f32 %v892, %v957
      %v974 = vsub.f32 %v893, %v958
      %v975 = vsub.f32 %v894, %v959
      %v976 = vmul.f32 %v960, %v960
      %v977 = vmul.f32 %v961, %v961
      %v978 = vmul.f32 %v962, %v962
      %v979 = vmul.f32 %v963, %v963
      %v980 = vmul.f32 %v964, %v964
      %v981 = vmul.f32 %v965, %v965
      %v982 = vmul.f32 %v966, %v966
      %v983 = vmul.f32 %v967, %v967
      %v984 = vmul.f32 %v968, %v968
      %v985 = vmul.f32 %v969, %v969
      %v986 = vmul.f32 %v970, %v970
      %v987 = vmul.f32 %v971, %v971
      %v988 = vmul.f32 %v972, %v972
      %v989 = vmul.f32 %v973, %v973
      %v990 = vmul.f32 %v974, %v974
      %v991 = vmul.f32 %v975, %v975
      %v992 = vsel %vm669, %v976, 0.0
      %993 = vadd.xlane.f32.xlu0 %v992
      %v994 = vpop.xlane.xlu0 %993
      %v995 = vsel %vm669, %v977, 0.0
      %996 = vadd.xlane.f32.xlu0 %v995
      %v997 = vpop.xlane.xlu0 %996
      %v998 = vsel %vm669, %v978, 0.0
      %999 = vadd.xlane.f32.xlu0 %v998
      %v1000 = vpop.xlane.xlu0 %999
      %v1001 = vsel %vm669, %v979, 0.0
      %1002 = vadd.xlane.f32.xlu0 %v1001
      %v1003 = vpop.xlane.xlu0 %1002
      %v1004 = vsel %vm669, %v980, 0.0
      %1005 = vadd.xlane.f32.xlu0 %v1004
      %v1006 = vpop.xlane.xlu0 %1005
      %v1007 = vsel %vm669, %v981, 0.0
      %1008 = vadd.xlane.f32.xlu0 %v1007
      %v1009 = vpop.xlane.xlu0 %1008
      %v1010 = vsel %vm669, %v982, 0.0
      %1011 = vadd.xlane.f32.xlu0 %v1010
      %v1012 = vpop.xlane.xlu0 %1011
      %v1013 = vsel %vm669, %v983, 0.0
      %1014 = vadd.xlane.f32.xlu0 %v1013
      %v1015 = vpop.xlane.xlu0 %1014
      %v1016 = vsel %vm669, %v984, 0.0
      %1017 = vadd.xlane.f32.xlu0 %v1016
      %v1018 = vpop.xlane.xlu0 %1017
      %v1019 = vsel %vm669, %v985, 0.0
      %1020 = vadd.xlane.f32.xlu0 %v1019
      %v1021 = vpop.xlane.xlu0 %1020
      %v1022 = vsel %vm669, %v986, 0.0
      %1023 = vadd.xlane.f32.xlu0 %v1022
      %v1024 = vpop.xlane.xlu0 %1023
      %v1025 = vsel %vm669, %v987, 0.0
      %1026 = vadd.xlane.f32.xlu0 %v1025
      %v1027 = vpop.xlane.xlu0 %1026
      %v1028 = vsel %vm669, %v988, 0.0
      %1029 = vadd.xlane.f32.xlu0 %v1028
      %v1030 = vpop.xlane.xlu0 %1029
      %v1031 = vsel %vm669, %v989, 0.0
      %1032 = vadd.xlane.f32.xlu0 %v1031
      %v1033 = vpop.xlane.xlu0 %1032
      %v1034 = vsel %vm669, %v990, 0.0
      %1035 = vadd.xlane.f32.xlu0 %v1034
      %v1036 = vpop.xlane.xlu0 %1035
      %v1037 = vsel %vm669, %v991, 0.0
      %1038 = vadd.xlane.f32.xlu0 %v1037
      %v1039 = vpop.xlane.xlu0 %1038
      %v1040 = vmul.f32 %v994, %v943
      %v1041 = vmul.f32 %v997, %v943
      %v1042 = vmul.f32 %v1000, %v943
      %v1043 = vmul.f32 %v1003, %v943
      %v1044 = vmul.f32 %v1006, %v943
      %v1045 = vmul.f32 %v1009, %v943
      %v1046 = vmul.f32 %v1012, %v943
      %v1047 = vmul.f32 %v1015, %v943
      %v1048 = vmul.f32 %v1018, %v943
      %v1049 = vmul.f32 %v1021, %v943
      %v1050 = vmul.f32 %v1024, %v943
      %v1051 = vmul.f32 %v1027, %v943
      %v1052 = vmul.f32 %v1030, %v943
      %v1053 = vmul.f32 %v1033, %v943
      %v1054 = vmul.f32 %v1036, %v943
      %v1055 = vmul.f32 %v1039, %v943
      %v1056 = vadd.f32 %v1040, 1e-05
      %v1057 = vadd.f32 %v1041, 1e-05
      %v1058 = vadd.f32 %v1042, 1e-05
      %v1059 = vadd.f32 %v1043, 1e-05
      %v1060 = vadd.f32 %v1044, 1e-05
      %v1061 = vadd.f32 %v1045, 1e-05
      %v1062 = vadd.f32 %v1046, 1e-05
      %v1063 = vadd.f32 %v1047, 1e-05
      %v1064 = vadd.f32 %v1048, 1e-05
      %v1065 = vadd.f32 %v1049, 1e-05
      %v1066 = vadd.f32 %v1050, 1e-05
      %v1067 = vadd.f32 %v1051, 1e-05
      %v1068 = vadd.f32 %v1052, 1e-05
      %v1069 = vadd.f32 %v1053, 1e-05
      %v1070 = vadd.f32 %v1054, 1e-05
      %v1071 = vadd.f32 %v1055, 1e-05
      %v1072 = vrsqrt.pop %v1056
      %v1073 = vrsqrt.pop %v1057
      %v1074 = vrsqrt.pop %v1058
      %v1075 = vrsqrt.pop %v1059
      %v1076 = vrsqrt.pop %v1060
      %v1077 = vrsqrt.pop %v1061
      %v1078 = vrsqrt.pop %v1062
      %v1079 = vrsqrt.pop %v1063
      %v1080 = vrsqrt.pop %v1064
      %v1081 = vrsqrt.pop %v1065
      %v1082 = vrsqrt.pop %v1066
      %v1083 = vrsqrt.pop %v1067
      %v1084 = vrsqrt.pop %v1068
      %v1085 = vrsqrt.pop %v1069
      %v1086 = vrsqrt.pop %v1070
      %v1087 = vrsqrt.pop %v1071
      %v1088 = vmul.f32 %v960, %v1072
      %v1089 = vmul.f32 %v961, %v1073
      %v1090 = vmul.f32 %v962, %v1074
      %v1091 = vmul.f32 %v963, %v1075
      %v1092 = vmul.f32 %v964, %v1076
      %v1093 = vmul.f32 %v965, %v1077
      %v1094 = vmul.f32 %v966, %v1078
      %v1095 = vmul.f32 %v967, %v1079
      %v1096 = vmul.f32 %v968, %v1080
      %v1097 = vmul.f32 %v969, %v1081
      %v1098 = vmul.f32 %v970, %v1082
      %v1099 = vmul.f32 %v971, %v1083
      %v1100 = vmul.f32 %v972, %v1084
      %v1101 = vmul.f32 %v973, %v1085
      %v1102 = vmul.f32 %v974, %v1086
      %v1103 = vmul.f32 %v975, %v1087
      %v1105 = vlaneseq
      %v1106 = vshrl.u32 %v1105, 7
      %v1107 = vsub.s32 0, %v1106
      %v1108 = vrot.slane %v324, %v1107
      %v1110 = vmul.f32 %v1088, %v1108
      %v1111 = vmul.f32 %v1089, %v1108
      %v1112 = vmul.f32 %v1090, %v1108
      %v1113 = vmul.f32 %v1091, %v1108
      %v1114 = vmul.f32 %v1092, %v1108
      %v1115 = vmul.f32 %v1093, %v1108
      %v1116 = vmul.f32 %v1094, %v1108
      %v1117 = vmul.f32 %v1095, %v1108
      %v1118 = vmul.f32 %v1096, %v1108
      %v1119 = vmul.f32 %v1097, %v1108
      %v1120 = vmul.f32 %v1098, %v1108
      %v1121 = vmul.f32 %v1099, %v1108
      %v1122 = vmul.f32 %v1100, %v1108
      %v1123 = vmul.f32 %v1101, %v1108
      %v1124 = vmul.f32 %v1102, %v1108
      %v1125 = vmul.f32 %v1103, %v1108
      %v1127 = vlaneseq
      %v1128 = vshrl.u32 %v1127, 7
      %v1129 = vsub.s32 0, %v1128
      %v1130 = vrot.slane %v325, %v1129
      %v1132 = vadd.f32 %v1110, %v1130
      %v1133 = vadd.f32 %v1111, %v1130
      %v1134 = vadd.f32 %v1112, %v1130
      %v1135 = vadd.f32 %v1113, %v1130
      %v1136 = vadd.f32 %v1114, %v1130
      %v1137 = vadd.f32 %v1115, %v1130
      %v1138 = vadd.f32 %v1116, %v1130
      %v1139 = vadd.f32 %v1117, %v1130
      %v1140 = vadd.f32 %v1118, %v1130
      %v1141 = vadd.f32 %v1119, %v1130
      %v1142 = vadd.f32 %v1120, %v1130
      %v1143 = vadd.f32 %v1121, %v1130
      %v1144 = vadd.f32 %v1122, %v1130
      %v1145 = vadd.f32 %v1123, %v1130
      %v1146 = vadd.f32 %v1124, %v1130
      %v1147 = vadd.f32 %v1125, %v1130
      %1148 = vst.msk [vmem:[%s318] sm:$0xff] %vm669, %v1132
      %1149 = vst.msk [vmem:[%s318 + $0x8] sm:$0xff] %vm669, %v1133
      %1150 = vst.msk [vmem:[%s318 + $0x10] sm:$0xff] %vm669, %v1134
      %1151 = vst.msk [vmem:[%s318 + $0x18] sm:$0xff] %vm669, %v1135
      %1152 = vst.msk [vmem:[%s318 + $0x20] sm:$0xff] %vm669, %v1136
      %1153 = vst.msk [vmem:[%s318 + $0x28] sm:$0xff] %vm669, %v1137
      %1154 = vst.msk [vmem:[%s318 + $0x30] sm:$0xff] %vm669, %v1138
      %1155 = vst.msk [vmem:[%s318 + $0x38] sm:$0xff] %vm669, %v1139
      %1156 = vst.msk [vmem:[%s318 + $0x40] sm:$0xff] %vm669, %v1140
      %1157 = vst.msk [vmem:[%s318 + $0x48] sm:$0xff] %vm669, %v1141
      %1158 = vst.msk [vmem:[%s318 + $0x50] sm:$0xff] %vm669, %v1142
      %1159 = vst.msk [vmem:[%s318 + $0x58] sm:$0xff] %vm669, %v1143
      %1160 = vst.msk [vmem:[%s318 + $0x60] sm:$0xff] %vm669, %v1144
      %1161 = vst.msk [vmem:[%s318 + $0x68] sm:$0xff] %vm669, %v1145
      %1162 = vst.msk [vmem:[%s318 + $0x70] sm:$0xff] %vm669, %v1146
      %1163 = vst.msk [vmem:[%s318 + $0x78] sm:$0xff] %vm669, %v1147
      %p1164 = scmp.lt.s32.totalorder %s18, 1
      %s1165 = scalar_select %p1164, %s18, 1
      %s1166 = smul.addr %s1165, 16
      %s1167 = smul.addr %s1166, 8
      %s1168 = scalar_lea.vmem %s7, %s1167
      // Predicated region
      $region49: #{tpu_custom_call.1} parent=47 // pred_check
        %p1169 = pneg %p198
      $region50: #{tpu_custom_call.1} parent=47 // pred_check_branch
        %1171 = sbr.rel (%p1169) target = $region52
      $region51: #{tpu_custom_call.1} parent=47 // pred_region
        _
      $region52: #{tpu_custom_call.1} parent=47 // pred_fallthru
        _
    $region48: #{tpu_custom_call.1} parent=5 // pred_fallthru
      _
    %p1172 = scmp.le.s32.totalorder 2, %s13
    // Predicated region
    $region53: #{tpu_custom_call.1} parent=5 // pred_check
      %p1173 = pneg %p1172
    $region54: #{tpu_custom_call.1} parent=5 // pred_check_branch
      %1175 = sbr.rel (%p1173) target = $region56
    $region55: #{tpu_custom_call.1} parent=5 // pred_region
      %s1176 = ssub.s32 %s13, 2
      // Predicated region
      $region57: #{tpu_custom_call.1} parent=55 // pred_check
        %p1177 = pneg %p204
      $region58: #{tpu_custom_call.1} parent=55 // pred_check_branch
        %1179 = sbr.rel (%p1177) target = $region60
      $region59: #{tpu_custom_call.1} parent=55 // pred_region
        %p1180 = scmp.lt.s32.totalorder %s19, 1
        %s1181 = scalar_select %p1180, %s19, 1
        %s1182 = smul.addr %s1181, 16
        %s1183 = smul.addr %s1182, 8
        %s1184 = scalar_lea.vmem %s7, %s1183
      $region60: #{tpu_custom_call.1} parent=55 // pred_fallthru
        _
    $region56: #{tpu_custom_call.1} parent=5 // pred_fallthru
      _
  $region6: #{tpu_custom_call.1} parent=0 // loop_footer
    %s17 = sadd.s32 1, %s13
  $region7: #{tpu_custom_call.1} parent=0 // loop_footer_branch
    %12 = sbr.rel target = $region3
  $region8: #{tpu_custom_call.1} parent=0 // loop_exit
    _

</llo_original>
